<compile_context>
chip_gen: v5e
topology: v5e:2x2
jax: 0.10.0
libtpu: 0.0.40
codegen_flags: <defaults>
</compile_context>

<pallas_src>
import jax
import jax.numpy as jnp
from jax.experimental import pallas as pl
from jax.experimental.pallas import tpu as pltpu

N_PAD = 128  # lane-dense padded output width (real n_out = 2)


def _round_up(x, m):
    return ((x + m - 1) // m) * m


def _choose_tb(B):
    """Batch tile size.

    Small batches: one full-array tile (block == array dim, so no (8,128)
    constraint on that axis and no padding).  Large batches: size the tile for
    DMA amortization (1024 rows ~ 86% of HBM roofline), but keep >= 2 grid
    steps so v7x's two TensorCores both get work via the 'parallel' axis.
    """
    if B < 512:
        return B
    return min(1024, _round_up(pl.cdiv(B, 2), 256))


# ----------------------------------------------------------------------------
# Pallas kernel: pooled -> (dropout: identity in eval) -> ReLU -> folded Linear
# ----------------------------------------------------------------------------
def _make_head_kernel(B, TB, mask_tail):
    def kernel(x_ref, w_ref, b_ref, o_ref):
        # ReLU in f32 on the VPU (Dropout(0.1) is identity at inference).
        x = jnp.maximum(x_ref[...], 0.0)
        if mask_tail:
            # Last grid step's block overruns the batch; those rows of the
            # VMEM buffer are undefined -> zero them explicitly.
            row = pl.program_id(0) * TB + jax.lax.broadcasted_iota(
                jnp.int32, x.shape, 0
            )
            x = jnp.where(row < B, x, 0.0)
        # bf16 cast happens here (VPU slack), not as a wrapper-side XLA pass.
        acc = jnp.dot(
            x.astype(jnp.bfloat16), w_ref[...], preferred_element_type=jnp.float32
        )
        # Lane-dense 128-wide bf16 store (halves padded writeback vs f32).
        o_ref[...] = (acc + b_ref[...]).astype(o_ref.dtype)

    return kernel


def climate_head_pallas(pooled, w_head, b_head, n_out):
    """pooled: [B, H] float32.  w_head: [H, N_PAD] bf16, b_head: [1, N_PAD] f32.
    Returns logits [B, n_out] float32."""
    B, H = pooled.shape
    n_pad = w_head.shape[1]

    TB = _choose_tb(B)
    grid = pl.cdiv(B, TB)
    mask_tail = (B % TB) != 0

    kernel = _make_head_kernel(B, TB, mask_tail)

    cost = pl.CostEstimate(
        flops=2 * B * H * n_pad,
        transcendentals=0,
        bytes_accessed=int(
            B * H * pooled.dtype.itemsize      # pooled activations (f32 read)
            + H * n_pad * 2                    # folded bf16 weight
            + n_pad * 4                        # folded f32 bias
            + B * n_pad * 2                    # bf16 padded logits write
        ),
    )

    out = pl.pallas_call(
        kernel,
        out_shape=jax.ShapeDtypeStruct((B, n_pad), jnp.bfloat16),
        grid=(grid,),
        in_specs=[
            pl.BlockSpec((TB, H), lambda i: (i, 0)),      # pooled tile (pipelined)
            pl.BlockSpec((H, n_pad), lambda i: (0, 0)),   # folded weight, resident
            pl.BlockSpec((1, n_pad), lambda i: (0, 0)),   # folded bias, resident
        ],
        out_specs=pl.BlockSpec((TB, n_pad), lambda i: (i, 0)),
        compiler_params=pltpu.CompilerParams(
            dimension_semantics=("parallel",),            # megacore split on v7x
            vmem_limit_bytes=32 * 1024 * 1024,            # raise v5e's 16 MiB default
        ),
        cost_estimate=cost,
    )(pooled, w_head, b_head)

    # Slice the 2 real logit lanes; restore the module's f32 output dtype.
    return out[:, :n_out].astype(jnp.float32)


# ----------------------------------------------------------------------------
# Parameter prep: fold the activation-free 3-Linear head into one matmul
# ----------------------------------------------------------------------------
def fold_head_params(params, dtype=jnp.bfloat16, n_pad=N_PAD):
    w1, b1 = params["w1"], params["b1"]
    w2, b2 = params["w2"], params["b2"]
    w3, b3 = params["w3"], params["b3"]
    w = (w1 @ w2) @ w3                               # (H, n_out), f32, exact fold
    b = b1 @ w2 @ w3 + b2 @ w3 + b3                  # (1, n_out), f32
    n_out = w.shape[1]
    w_p = jnp.zeros((w.shape[0], n_pad), jnp.float32).at[:, :n_out].set(w)
    b_p = jnp.zeros((1, n_pad), jnp.float32).at[:, :n_out].set(b)
    return w_p.astype(dtype), b_p, n_out


# ----------------------------------------------------------------------------
# Full forward: stand-in "bert" (glue) + Pallas head
# ----------------------------------------------------------------------------
def climate_identifier_forward(input_ids, attention_mask, params):
    # TODO(synk): the pretrained BERT/RoBERTa/XLNet/GPT backbone has no
    # in-script equivalent (needs a checkpoint); replaced by a deterministic
    # masked embedding lookup producing hidden_states [B, S, H].
    emb = params["emb_table"][input_ids]                       # [B, S, H]
    hidden_states = emb * attention_mask[..., None].astype(emb.dtype)

    # [:, 0, :] pooling.  With a real Pallas backbone this slice would be
    # folded into the head's input BlockSpec; here the backbone is XLA glue,
    # so the slice fuses with the embedding lookup.
    pooled = hidden_states[:, 0, :]                            # [B, H] f32

    return climate_head_pallas(
        pooled, params["w_head"], params["b_head"], params["n_out"]
    )


def init_params(key, vocab_size, hidden_size):
    ks = jax.random.split(key, 7)
    s = 0.1
    return {
        "emb_table": s * jax.random.normal(ks[0], (vocab_size, hidden_size), jnp.float32),
        # weights stored as (in_features, out_features) == torch Linear weight.T
        "w1": s * jax.random.normal(ks[1], (hidden_size, 128), jnp.float32),
        "b1": s * jax.random.normal(ks[2], (1, 128), jnp.float32),
        "w2": s * jax.random.normal(ks[3], (128, 128), jnp.float32),
        "b2": s * jax.random.normal(ks[4], (1, 128), jnp.float32),
        "w3": s * jax.random.normal(ks[5], (128, 2), jnp.float32),
        "b3": s * jax.random.normal(ks[6], (1, 2), jnp.float32),
    }


def _bf16_ref(pooled, w_head, b_head, n_out):
    """Reference matching the kernel's numerics (relu f32 -> bf16 -> MXU f32
    acc -> +bias -> bf16 store -> f32)."""
    x = jnp.maximum(pooled, 0.0).astype(jnp.bfloat16)
    acc = jnp.dot(x, w_head, preferred_element_type=jnp.float32) + b_head
    return acc.astype(jnp.bfloat16).astype(jnp.float32)[:, :n_out]


if __name__ == "__main__":
    # Small, deterministic example shapes
    B, S, H = 2, 8, 32
    VOCAB = 64

    key = jax.random.PRNGKey(0)
    k_ids, k_params, k_big = jax.random.split(key, 3)

    input_ids = jax.random.randint(k_ids, (B, S), 0, VOCAB, dtype=jnp.int32)
    attention_mask = jnp.ones((B, S), jnp.int32)

    params = init_params(k_params, VOCAB, H)
    w_head, b_head, n_out = fold_head_params(params)
    params.update(w_head=w_head, b_head=b_head, n_out=n_out)

    logits = climate_identifier_forward(input_ids, attention_mask, params)
    logits = jax.block_until_ready(logits)
    assert logits.shape == (B, 2), logits.shape

    # ------------------------------------------------------------------
    # Pure-JAX references
    # ------------------------------------------------------------------
    emb = params["emb_table"][input_ids] * attention_mask[..., None].astype(jnp.float32)
    pooled = emb[:, 0, :]
    x = jnp.maximum(pooled, 0.0)

    # (1) exact, unfolded fp32 reference (the module spec)
    ref_exact = ((x @ params["w1"] + params["b1"]) @ params["w2"] + params["b2"]) \
        @ params["w3"] + params["b3"]

    # (2) folded fp32 reference — validates the algebraic fold is exact
    w_f32 = (params["w1"] @ params["w2"]) @ params["w3"]
    b_f32 = params["b1"] @ params["w2"] @ params["w3"] + params["b2"] @ params["w3"] + params["b3"]
    ref_fold = x @ w_f32 + b_f32
    assert jnp.allclose(ref_fold, ref_exact, atol=1e-5, rtol=1e-4), "fold mismatch"

    # (3) bf16-matched reference — validates the Pallas kernel tightly
    ref_bf = _bf16_ref(pooled, params["w_head"], params["b_head"], n_out)
    assert jnp.allclose(logits, ref_bf, atol=1e-2, rtol=2e-2), "kernel mismatch (bf16 ref)"

    # (4) loose end-to-end sanity vs the fp32 module spec (bf16 rounding is an
    #     accepted inference approximation)
    assert jnp.allclose(logits, ref_exact, atol=1e-2, rtol=1e-1), "mismatch vs fp32 reference"

    # (5) exercise the large-batch / ragged-tail path (grid > 1, in-kernel
    #     tail masking, megacore-parallel axis) directly on the head.
    B2 = 520
    pooled_big = 0.1 * jax.random.normal(k_big, (B2, H), jnp.float32)
    logits_big = climate_head_pallas(pooled_big, params["w_head"], params["b_head"], n_out)
    logits_big = jax.block_until_ready(logits_big)
    assert logits_big.shape == (B2, 2), logits_big.shape
    ref_big = _bf16_ref(pooled_big, params["w_head"], params["b_head"], n_out)
    assert jnp.allclose(logits_big, ref_big, atol=1e-2, rtol=2e-2), "ragged-tile mismatch"

    print("KERNEL_OK")
</pallas_src>

<mosaic_0001>
module attributes {stable_mosaic.version = 11 : i64} {
  func.func @kernel(%arg0: i32, %arg1: memref<2x32xf32, #tpu.memory_space<vmem>>, %arg2: memref<32x128xbf16, #tpu.memory_space<vmem>>, %arg3: memref<1x128xf32, #tpu.memory_space<vmem>>, %arg4: memref<2x128xbf16, #tpu.memory_space<vmem>>) attributes {dimension_semantics = [#tpu.dimension_semantics<parallel>], iteration_bounds = array<i64: 1>, scalar_prefetch = 0 : i64, scratch_operands = 0 : i64, tpu.core_type = #tpu.core_type<tc>, window_params = [{transform_indices = @transform_0, window_bounds = array<i64: 2, 32>}, {pipeline_mode = #tpu.pipeline_mode<synchronous>, transform_indices = @transform_1, window_bounds = array<i64: 32, 128>}, {pipeline_mode = #tpu.pipeline_mode<synchronous>, transform_indices = @transform_2, window_bounds = array<i64: 1, 128>}, {transform_indices = @transform_3, window_bounds = array<i64: 2, 128>}]} {
    %c0 = arith.constant 0 : index
    %c0_0 = arith.constant 0 : index
    %0 = vector.load %arg1[%c0, %c0_0] : memref<2x32xf32, #tpu.memory_space<vmem>>, vector<2x32xf32>
    %cst = arith.constant 0.000000e+00 : f32
    %1 = vector.broadcast %cst : f32 to vector<2x32xf32>
    %2 = arith.maximumf %0, %1 : vector<2x32xf32>
    %3 = arith.truncf %2 : vector<2x32xf32> to vector<2x32xbf16>
    %c0_1 = arith.constant 0 : index
    %c0_2 = arith.constant 0 : index
    %4 = vector.load %arg2[%c0_1, %c0_2] : memref<32x128xbf16, #tpu.memory_space<vmem>>, vector<32x128xbf16>
    %cst_3 = arith.constant dense<0.000000e+00> : vector<2x128xf32>
    %5 = tpu.matmul %3, %4, %cst_3 {dimension_numbers = #tpu.dot_dimension_numbers<[1], [0], [0], [1], [0, 0, 1, 1], [], []>} : vector<2x32xbf16>, vector<32x128xbf16>, vector<2x128xf32> -> vector<2x128xf32>
    %c0_4 = arith.constant 0 : index
    %c0_5 = arith.constant 0 : index
    %6 = vector.load %arg3[%c0_4, %c0_5] : memref<1x128xf32, #tpu.memory_space<vmem>>, vector<1x128xf32>
    %7 = vector.broadcast %6 : vector<1x128xf32> to vector<2x128xf32>
    %8 = arith.addf %5, %7 : vector<2x128xf32>
    %9 = arith.truncf %8 : vector<2x128xf32> to vector<2x128xbf16>
    %c0_6 = arith.constant 0 : index
    %c0_7 = arith.constant 0 : index
    %10 = vector.load %arg4[%c0_6, %c0_7] : memref<2x128xbf16, #tpu.memory_space<vmem>>, vector<2x128xbf16>
    tpu.vector_store %arg4[%c0_6, %c0_7], %9 {strides = array<i32>} : memref<2x128xbf16, #tpu.memory_space<vmem>>, vector<2x128xbf16>,
    return
  }
  func.func @transform_0(%arg0: i32) -> (i32, i32) {
    %c0_i32 = arith.constant 0 : i32
    %c0_i32_0 = arith.constant 0 : i32
    return %arg0, %c0_i32 : i32, i32
  }
  func.func @transform_1(%arg0: i32) -> (i32, i32) {
    %c0_i32 = arith.constant 0 : i32
    %c0_i32_0 = arith.constant 0 : i32
    %c0_i32_1 = arith.constant 0 : i32
    return %c0_i32, %c0_i32_0 : i32, i32
  }
  func.func @transform_2(%arg0: i32) -> (i32, i32) {
    %c0_i32 = arith.constant 0 : i32
    %c0_i32_0 = arith.constant 0 : i32
    %c0_i32_1 = arith.constant 0 : i32
    return %c0_i32, %c0_i32_0 : i32, i32
  }
  func.func @transform_3(%arg0: i32) -> (i32, i32) {
    %c0_i32 = arith.constant 0 : i32
    %c0_i32_0 = arith.constant 0 : i32
    return %arg0, %c0_i32 : i32, i32
  }
}

</mosaic_0001>

<llo_original>
// kernel: tpu_custom_call.1
$region0: #{tpu_custom_call.1}
  #allocation0 [shape = 'u32[]', space=smem, size = 0x4, offset = 0x4, fixed_abs, tag = 'smem constant byte address 0x4 - core index']
  #allocation1 [shape = 'u32[72,128]{1,0:T(1,128)}', space=vmem, size = 0x9000, scoped, tag = 'internal scratch']
  %s0 = inlined_call_operand.hbm [shape: f32[2,32], index: 0, kind: input, shape index: {}]
  %s1 = inlined_call_operand.hbm [shape: bf16[32,128], index: 1, kind: input, shape index: {}]
  %s2 = inlined_call_operand.vmem [shape: f32[1,128], index: 2, kind: input, shape index: {}]
  %s3 = inlined_call_operand.hbm [shape: bf16[2,128], index: 3, kind: output, shape index: {}]
  %s4 = sld [smem:[#allocation0]]
  $region30: #{tpu_custom_call.1} parent=0
    _
  %s6 = ssub.s32 1, %s4
  %s7 = scalar_select 0, %s6, %s4
  $region1: #{tpu_custom_call.1} parent=0
    #allocation2 [shape = 'u8[1024]{0}', space=vmem, size = 0x400, scoped, tag = 'input window, operand 0, single buffered']
    #allocation3 [shape = 's32[1]{0}', space=sflag, size = 0x4, scoped, tag = 'scoped memory for tpu_custom_call.1']
    #allocation4 [shape = 's32[1]{0}', space=sflag, size = 0x4, scoped, tag = 'scoped memory for tpu_custom_call.1']
    #allocation5 [shape = 'u8[8192]{0}', space=vmem, size = 0x2000, scoped, tag = 'input window, operand 1, single buffered']
    #allocation6 [shape = 's32[1]{0}', space=sflag, size = 0x4, scoped, tag = 'scoped memory for tpu_custom_call.1']
    #allocation7 [shape = 'u8[512]{0}', space=vmem, size = 0x400, scoped, tag = 'output window, operand 0, single buffered']
    %8 = vsyncpa [#allocation3], 0
    %9 = vsyncpa [#allocation6], 0
    %10 = vsyncpa [#allocation4], 0
    // Predicated region
    $region2: #{tpu_custom_call.1} parent=1 // pred_check
      _
    $region3: #{tpu_custom_call.1} parent=1 // pred_check_branch
      %12 = sbr.rel (0) target = $region5
    $region4: #{tpu_custom_call.1} parent=1 // pred_region
      %14 = vsyncadd [#allocation3], 0
      %s16 = sshll.u32 %s0, 4
      %s17 = int_to_ptr.hbm [resolvable:$true] %s16
      %s18 = sshll.u32 [#allocation2], 4
      %s19 = int_to_ptr.vmem [resolvable:$true] %s18
      %21 = dma.hbm_to_vmem [thread:$0]  %s17, 32, %s19, [#allocation3]
    $region5: #{tpu_custom_call.1} parent=1 // pred_fallthru
      _
    // Predicated region
    $region6: #{tpu_custom_call.1} parent=1 // pred_check
      _
    $region7: #{tpu_custom_call.1} parent=1 // pred_check_branch
      %23 = sbr.rel (0) target = $region9
    $region8: #{tpu_custom_call.1} parent=1 // pred_region
      %25 = vsyncadd [#allocation6], 0
      %s26 = sshll.u32 %s1, 4
      %s27 = int_to_ptr.hbm [resolvable:$true] %s26
      %s28 = sshll.u32 [#allocation5], 4
      %s29 = int_to_ptr.vmem [resolvable:$true] %s28
      %34 = dma.hbm_to_vmem [thread:$0]  %s27, 256, %s29, [#allocation6], 64, 64, 4
    $region9: #{tpu_custom_call.1} parent=1 // pred_fallthru
      _
    // Predicated region
    $region10: #{tpu_custom_call.1} parent=1 // pred_check
      _
    $region11: #{tpu_custom_call.1} parent=1 // pred_check_branch
      %36 = sbr.rel (0) target = $region13
    $region12: #{tpu_custom_call.1} parent=1 // pred_region
      _
    $region13: #{tpu_custom_call.1} parent=1 // pred_fallthru
      _
    // Predicated region
    $region14: #{tpu_custom_call.1} parent=1 // pred_check
      _
    $region15: #{tpu_custom_call.1} parent=1 // pred_check_branch
      %38 = sbr.rel (0) target = $region17
    $region16: #{tpu_custom_call.1} parent=1 // pred_region
      %40 = dma.done [#allocation3], 32
    $region17: #{tpu_custom_call.1} parent=1 // pred_fallthru
      _
    // Predicated region
    $region18: #{tpu_custom_call.1} parent=1 // pred_check
      _
    $region19: #{tpu_custom_call.1} parent=1 // pred_check_branch
      %42 = sbr.rel (0) target = $region21
    $region20: #{tpu_custom_call.1} parent=1 // pred_region
      %44 = dma.done [#allocation6], 256
    $region21: #{tpu_custom_call.1} parent=1 // pred_fallthru
      _
    %v46 = vld [vmem:[#allocation2] sm:$0x3]
    %v47 = vmax.f32 %v46, 0.0
    %v48 = vpack.c.bf16 %v47, %v47
    %v49 = vld [vmem:[#allocation5] sm:$0xf]
    %v50 = vld [vmem:[#allocation5 + $0x4] sm:$0xf]
    %v51 = vld [vmem:[#allocation5 + $0x8] sm:$0xf]
    %v52 = vld [vmem:[#allocation5 + $0xc] sm:$0xf]
    %v53 = vld [vmem:[%s2] sm:$0x1]
    %v55 = vperm.slane %v53, 0
    %v61 = vunpack.c.l.b16 %v49
    %v62 = vunpack.c.l.b16 %v50
    %v63 = vunpack.c.l.b16 %v51
    %v64 = vunpack.c.l.b16 %v52
    %v65 = vpack.c.b16 %v62, %v61
    %v66 = vpack.c.b16 %v64, %v63
    %vm69 = vcmask 261120
    %v71 = vsel %vm69, %v48, 0
    %73 = vmatpush.bf16.msra.mxu0 0
    %74 = vmatpush.bf16.msra.mxu0 0
    %75 = vmatpush.bf16.msra.mxu0 0
    %76 = vmatpush.bf16.msra.mxu0 0
    %77 = vmatpush.bf16.msra.mxu0 0
    %78 = vmatpush.bf16.msra.mxu0 0
    %79 = vmatpush.bf16.msra.mxu0 %v66
    %80 = vmatpush.bf16.msra.mxu0 %v65
    %81 = vmatmul.bf16.gmra.mxu0 %v71
    %v82 = vpop.f32.mrf.mxu0
    %v83 = vadd.f32 %v55, %v82
    %v84 = vpop.f32.mrf.mxu0
    %85 = vdwg.mxu0
    %v86 = vpack.c.bf16 %v83, %v83
    %87 = vst [vmem:[#allocation7] sm:$0x1] %v86
    // Predicated region
    $region22: #{tpu_custom_call.1} parent=1 // pred_check
      _
    $region23: #{tpu_custom_call.1} parent=1 // pred_check_branch
      %89 = sbr.rel (0) target = $region25
    $region24: #{tpu_custom_call.1} parent=1 // pred_region
      %91 = vsyncadd [#allocation4], 0
      %s93 = sshll.u32 [#allocation7], 4
      %s94 = int_to_ptr.vmem [resolvable:$true] %s93
      %s95 = sshll.u32 %s3, 4
      %s96 = int_to_ptr.hbm [resolvable:$true] %s95
      %98 = dma.vmem_to_hbm [thread:$0]  %s94, 16, %s96, [#allocation4]
    $region25: #{tpu_custom_call.1} parent=1 // pred_fallthru
      _
    // Predicated region
    $region26: #{tpu_custom_call.1} parent=1 // pred_check
      _
    $region27: #{tpu_custom_call.1} parent=1 // pred_check_branch
      %100 = sbr.rel (0) target = $region29
    $region28: #{tpu_custom_call.1} parent=1 // pred_region
      %102 = dma.done [#allocation4], 16
    $region29: #{tpu_custom_call.1} parent=1 // pred_fallthru
      _
    %103 = vsyncpa [#allocation3], 1
    %104 = vsyncpa [#allocation6], 1
    %105 = vsyncpa [#allocation4], 1

</llo_original>
